<compile_context>
chip_gen: v7x
topology: tpu7x:2x2x1
jax: 0.10.0
libtpu: 0.0.40
codegen_flags: <defaults>
</compile_context>

<pallas_src>
import functools

import jax
import jax.numpy as jnp
from jax.experimental import pallas as pl
from jax.experimental.pallas import tpu as pltpu

EPS = 1e-8
IGNORE_INDEX = 255


def _round_up(x, m):
    return (x + m - 1) // m * m


def _vmem_limit_bytes():
    """Scoped-VMEM limit: physical capacity minus headroom, capped at 96 MiB."""
    cap = 64 * 1024 * 1024  # conservative fallback (v7x per-TC physical VMEM)
    try:
        info = pltpu.get_tpu_info()
        cap = int(getattr(info, "vmem_capacity_bytes", cap)) or cap
    except Exception:
        pass
    return min(cap - 16 * 1024 * 1024, 96 * 1024 * 1024)


def _pick_spatial_tile(num_classes, hw, itemsize, vmem_budget_bytes):
    """Lane-tile sized for ~6 MiB HBM per logits block, VMEM-budgeted.

    The VMEM accounting covers the double-buffered logits block, the cached
    int32 class-iota scratch and ~3 f32 C x tile elementwise temporaries, with
    dtype-aware sublane padding (f32 -> 8, bf16 -> 16, int8 -> 32 rows).
    """
    lane_total = _round_up(hw, 128)
    target_block_bytes = 6 * 1024 * 1024
    pack = max(8 * 4 // itemsize, 8)              # sublane packing per dtype
    c_in = _round_up(num_classes, pack)           # padded rows of the input block
    c_32 = _round_up(num_classes, 8)              # padded rows of 32-bit temps
    bytes_per_lane = (2 * c_in * itemsize         # double-buffered logits block
                      + c_32 * 4                  # cached class-iota scratch (i32)
                      + 3 * c_32 * 4              # in-kernel f32 temporaries
                      + 32)                       # labels + output accumulators
    tile_hbm = target_block_bytes // max(num_classes * itemsize, 1)
    tile_vmem = max(vmem_budget_bytes // bytes_per_lane, 128)
    tile = min(tile_hbm, tile_vmem, lane_total)
    # Floor at >=1024 lanes (4 KiB contiguous runs per class row of the DMA)
    # unless the VMEM budget or the array itself is smaller.
    tile = max(tile, min(1024, lane_total, tile_vmem))
    return max(tile // 128 * 128, 128)


def _ce_kernel(logit_ref, label_ref, loss_acc_ref, mask_acc_ref, class_iota_ref,
               *, ignore_index, hw, tile, needs_pos_mask):
    """One grid step: a (1, C, tile) slab of logits + (1, 1, tile) labels.

    Accumulates per-lane partial sums of masked CE loss and of the mask into
    the (1, 1, tile) output blocks, which stay resident across the spatial axis.
    """
    t_idx = pl.program_id(1)

    # First spatial tile of this image: zero the resident accumulators and
    # (re)materialize the grid-invariant class-index iota into VMEM scratch so
    # the per-step body does not spend a C x tile VPU pass regenerating it.
    @pl.when(t_idx == 0)
    def _():
        loss_acc_ref[...] = jnp.zeros_like(loss_acc_ref)
        mask_acc_ref[...] = jnp.zeros_like(mask_acc_ref)
        class_iota_ref[...] = jax.lax.broadcasted_iota(
            jnp.int32, class_iota_ref.shape, 0)

    x = logit_ref[0].astype(jnp.float32)          # (C, tile)  classes on sublanes
    lab = label_ref[0].astype(jnp.int32)          # (1, tile)  narrow dtype -> i32

    valid = lab != ignore_index                   # (1, tile)
    if needs_pos_mask:
        # Ragged last tile: mask lanes past H*W (compile-time gated).
        lane = jax.lax.broadcasted_iota(jnp.int32, lab.shape, 1)
        valid = jnp.logical_and(valid, t_idx * tile + lane < hw)
    mask = valid.astype(jnp.float32)
    safe_lab = jnp.where(valid, lab, 0)

    # Numerically stable log-sum-exp over the class (sublane) axis; reuse the
    # shifted logits (x - m) for the label pick so `x` dies early.
    m = jnp.max(x, axis=0, keepdims=True)                      # (1, tile)
    xm = x - m                                                 # (C, tile)
    lse = jnp.log(jnp.sum(jnp.exp(xm), axis=0, keepdims=True))  # logsumexp - m

    # Gather (logit[label] - m) via a cached one-hot compare (no cross-lane gather).
    onehot = class_iota_ref[...] == safe_lab                   # (C, tile)
    picked = jnp.sum(jnp.where(onehot, xm, 0.0), axis=0, keepdims=True)

    # where(), not multiply, so garbage in padded lanes never injects NaN/Inf.
    loss = jnp.where(valid, lse - picked, 0.0)                 # (1, tile)

    loss_acc_ref[0] = loss_acc_ref[0] + loss
    mask_acc_ref[0] = mask_acc_ref[0] + mask


def cross_entropy_loss(logits_nchw, label, *, ignore_index=IGNORE_INDEX,
                       eps=EPS, avg_non_ignore=True, tile=None):
    """Pallas implementation of CrossEntropyLoss.forward (weight=None path).

    logits_nchw: (N, C, H, W) float (f32 or bf16; bf16 halves HBM traffic,
                 softmax math is still f32 inside the kernel)
    label:       (N, H, W) integer (uint8/int16/int32 all accepted; narrow
                 dtypes are DMA'd narrow and upcast per-tile in the kernel)
    returns:     scalar float32 loss
    """
    # TODO(synk): class `weight` rescaling and `semantic_weights` are not
    #             implemented (module defaults are None, the path reproduced here).
    N, C, H, W = logits_nchw.shape
    hw = H * W

    x = logits_nchw.reshape(N, C, hw)                 # free reshape, no transpose
    if label.dtype == jnp.int64:                      # TPU-unfriendly; rest pass through
        label = label.astype(jnp.int32)
    lab = label.reshape(N, 1, hw)                     # free reshape, native dtype

    itemsize = jnp.dtype(logits_nchw.dtype).itemsize
    vmem_limit = int(_vmem_limit_bytes())
    if tile is None:
        tile = _pick_spatial_tile(C, hw, itemsize, int(vmem_limit * 0.75))
    tile = int(tile)
    if tile >= hw:
        tile = hw                                     # full-extent block is always legal
    else:
        tile = max(tile // 128 * 128, 128)
    s_tiles = pl.cdiv(hw, tile)

    kernel = functools.partial(
        _ce_kernel, ignore_index=ignore_index, hw=hw, tile=tile,
        needs_pos_mask=(hw % tile) != 0)

    loss_part, mask_part = pl.pallas_call(
        kernel,
        out_shape=(jax.ShapeDtypeStruct((N, 1, tile), jnp.float32),
                   jax.ShapeDtypeStruct((N, 1, tile), jnp.float32)),
        grid_spec=pltpu.PrefetchScalarGridSpec(
            num_scalar_prefetch=0,
            # N is "parallel": v7x megacore splits whole images across its two
            # TensorCores (no duplicated/clamped tiles); on 1-TC v5e/v6e this
            # is simply the serial batch loop.
            grid=(N, s_tiles),
            in_specs=[
                pl.BlockSpec((1, C, tile), lambda n, t: (n, 0, t)),
                pl.BlockSpec((1, 1, tile), lambda n, t: (n, 0, t)),
            ],
            out_specs=[
                pl.BlockSpec((1, 1, tile), lambda n, t: (n, 0, 0)),
                pl.BlockSpec((1, 1, tile), lambda n, t: (n, 0, 0)),
            ],
            scratch_shapes=[pltpu.VMEM((C, tile), jnp.int32)],   # cached class iota
        ),
        compiler_params=pltpu.CompilerParams(
            dimension_semantics=("parallel", "arbitrary"),
            vmem_limit_bytes=vmem_limit),
    )(x, lab)

    # mean over ALL pixels (including ignored), matching torch.mean semantics,
    # then normalize by mean(mask) + EPS.  The single cross-lane / cross-image
    # reduction of the vector partials happens once, here.
    total_pixels = jnp.float32(N * hw)
    mean_loss = jnp.sum(loss_part) / total_pixels
    if avg_non_ignore:
        mean_mask = jnp.sum(mask_part) / total_pixels
        return mean_loss / (mean_mask + eps)
    return mean_loss / (1.0 + eps)


def _reference_loss(logits_nchw, label, ignore_index=IGNORE_INDEX, eps=EPS):
    """Pure-JAX reference of the same math (for sanity checking)."""
    x = jnp.transpose(logits_nchw, (0, 2, 3, 1)).astype(jnp.float32)   # (N,H,W,C)
    lab = label.astype(jnp.int32)
    valid = lab != ignore_index
    safe = jnp.where(valid, lab, 0)
    lse = jax.scipy.special.logsumexp(x, axis=-1)
    picked = jnp.take_along_axis(x, safe[..., None], axis=-1)[..., 0]
    loss = (lse - picked) * valid.astype(jnp.float32)
    mask = valid.astype(jnp.float32)
    return jnp.mean(loss) / (jnp.mean(mask) + eps)


if __name__ == "__main__":
    key = jax.random.PRNGKey(0)
    k_logit, k_label, k_ign = jax.random.split(key, 3)

    N, C, H, W = 2, 4, 16, 16
    logits = jax.random.normal(k_logit, (N, C, H, W), dtype=jnp.float32)
    label = jax.random.randint(k_label, (N, H, W), 0, C, dtype=jnp.int32)
    # Sprinkle some ignore_index pixels to exercise masking.
    ignore_mask = jax.random.bernoulli(k_ign, 0.2, (N, H, W))
    label = jnp.where(ignore_mask, IGNORE_INDEX, label)

    out = cross_entropy_loss(logits, label)
    out = jax.block_until_ready(out)

    ref = jax.block_until_ready(_reference_loss(logits, label))
    assert jnp.allclose(out, ref, rtol=1e-5, atol=1e-5), (out, ref)

    print("KERNEL_OK")
</pallas_src>

<mosaic_0001>
module attributes {stable_mosaic.version = 11 : i64} {
  func.func @_ce_kernel(%arg0: i32, %arg1: i32, %arg2: memref<1x4x256xf32, #tpu.memory_space<vmem>>, %arg3: memref<1x1x256xi32, #tpu.memory_space<vmem>>, %arg4: memref<1x1x256xf32, #tpu.memory_space<vmem>>, %arg5: memref<1x1x256xf32, #tpu.memory_space<vmem>>, %arg6: memref<4x256xi32, #tpu.memory_space<vmem>>) attributes {dimension_semantics = [#tpu.dimension_semantics<parallel>, #tpu.dimension_semantics<arbitrary>], iteration_bounds = array<i64: 2, 1>, scalar_prefetch = 0 : i64, scratch_operands = 1 : i64, tpu.core_type = #tpu.core_type<tc>, window_params = [{transform_indices = @transform_0, window_bounds = array<i64: 1, 4, 256>}, {transform_indices = @transform_1, window_bounds = array<i64: 1, 1, 256>}, {transform_indices = @transform_2, window_bounds = array<i64: 1, 1, 256>}, {transform_indices = @transform_3, window_bounds = array<i64: 1, 1, 256>}]} {
    %c0_i32 = arith.constant 0 : i32
    %0 = arith.cmpi eq, %arg1, %c0_i32 : i32
    %1 = arith.extui %0 : i1 to i32
    %c0_i32_0 = arith.constant 0 : i32
    %2 = arith.cmpi ne, %1, %c0_i32_0 : i32
    scf.if %2 {
      %cst_25 = arith.constant 0.000000e+00 : f32
      %43 = vector.broadcast %cst_25 : f32 to vector<1x1x256xf32>
      %c0_26 = arith.constant 0 : index
      %c0_27 = arith.constant 0 : index
      %c0_28 = arith.constant 0 : index
      %44 = vector.load %arg4[%c0_26, %c0_27, %c0_28] : memref<1x1x256xf32, #tpu.memory_space<vmem>>, vector<1x1x256xf32>
      tpu.vector_store %arg4[%c0_26, %c0_27, %c0_28], %43 {strides = array<i32>} : memref<1x1x256xf32, #tpu.memory_space<vmem>>, vector<1x1x256xf32>,
      %cst_29 = arith.constant 0.000000e+00 : f32
      %45 = vector.broadcast %cst_29 : f32 to vector<1x1x256xf32>
      %c0_30 = arith.constant 0 : index
      %c0_31 = arith.constant 0 : index
      %c0_32 = arith.constant 0 : index
      %46 = vector.load %arg5[%c0_30, %c0_31, %c0_32] : memref<1x1x256xf32, #tpu.memory_space<vmem>>, vector<1x1x256xf32>
      tpu.vector_store %arg5[%c0_30, %c0_31, %c0_32], %45 {strides = array<i32>} : memref<1x1x256xf32, #tpu.memory_space<vmem>>, vector<1x1x256xf32>,
      %47 = tpu.iota {dimensions = array<i32: 0>} : vector<4x256xi32>
      %c0_33 = arith.constant 0 : index
      %c0_34 = arith.constant 0 : index
      %48 = vector.load %arg6[%c0_33, %c0_34] : memref<4x256xi32, #tpu.memory_space<vmem>>, vector<4x256xi32>
      tpu.vector_store %arg6[%c0_33, %c0_34], %47 {strides = array<i32>} : memref<4x256xi32, #tpu.memory_space<vmem>>, vector<4x256xi32>,
    } else {
    }
    %c0 = arith.constant 0 : index
    %c0_1 = arith.constant 0 : index
    %c0_2 = arith.constant 0 : index
    %3 = vector.load %arg2[%c0, %c0_1, %c0_2] : memref<1x4x256xf32, #tpu.memory_space<vmem>>, vector<1x4x256xf32>
    %4 = vector.shape_cast %3 : vector<1x4x256xf32> to vector<4x256xf32>
    %c0_3 = arith.constant 0 : index
    %c0_4 = arith.constant 0 : index
    %c0_5 = arith.constant 0 : index
    %5 = vector.load %arg3[%c0_3, %c0_4, %c0_5] : memref<1x1x256xi32, #tpu.memory_space<vmem>>, vector<1x1x256xi32>
    %6 = vector.shape_cast %5 : vector<1x1x256xi32> to vector<1x256xi32>
    %c255_i32 = arith.constant 255 : i32
    %7 = vector.broadcast %c255_i32 : i32 to vector<1x256xi32>
    %8 = arith.cmpi ne, %6, %7 : vector<1x256xi32>
    %9 = arith.extui %8 : vector<1x256xi1> to vector<1x256xi32>
    %10 = arith.sitofp %9 : vector<1x256xi32> to vector<1x256xf32>
    %c0_i32_6 = arith.constant 0 : i32
    %11 = vector.broadcast %c0_i32_6 : i32 to vector<1x256xi32>
    %12 = arith.select %8, %6, %11 : vector<1x256xi1>, vector<1x256xi32>
    %cst = arith.constant dense<0xFF800000> : vector<256xf32>
    %13 = vector.multi_reduction <maximumf>, %4, %cst [0] : vector<4x256xf32> to vector<256xf32>
    %14 = vector.shape_cast %13 : vector<256xf32> to vector<1x256xf32>
    %15 = vector.broadcast %14 : vector<1x256xf32> to vector<4x256xf32>
    %16 = arith.subf %4, %15 : vector<4x256xf32>
    %17 = math.exp %16 : vector<4x256xf32>
    %cst_7 = arith.constant dense<0.000000e+00> : vector<256xf32>
    %18 = vector.multi_reduction <add>, %17, %cst_7 [0] : vector<4x256xf32> to vector<256xf32>
    %19 = vector.shape_cast %18 : vector<256xf32> to vector<1x256xf32>
    %20 = math.log %19 : vector<1x256xf32>
    %c0_8 = arith.constant 0 : index
    %c0_9 = arith.constant 0 : index
    %21 = vector.load %arg6[%c0_8, %c0_9] : memref<4x256xi32, #tpu.memory_space<vmem>>, vector<4x256xi32>
    %22 = vector.broadcast %12 : vector<1x256xi32> to vector<4x256xi32>
    %23 = arith.cmpi eq, %21, %22 : vector<4x256xi32>
    %cst_10 = arith.constant 0.000000e+00 : f32
    %24 = vector.broadcast %cst_10 : f32 to vector<4x256xf32>
    %25 = arith.select %23, %16, %24 : vector<4x256xi1>, vector<4x256xf32>
    %cst_11 = arith.constant dense<0.000000e+00> : vector<256xf32>
    %26 = vector.multi_reduction <add>, %25, %cst_11 [0] : vector<4x256xf32> to vector<256xf32>
    %27 = vector.shape_cast %26 : vector<256xf32> to vector<1x256xf32>
    %28 = arith.subf %20, %27 : vector<1x256xf32>
    %cst_12 = arith.constant 0.000000e+00 : f32
    %29 = vector.broadcast %cst_12 : f32 to vector<1x256xf32>
    %30 = arith.select %8, %28, %29 : vector<1x256xi1>, vector<1x256xf32>
    %c0_13 = arith.constant 0 : index
    %c0_14 = arith.constant 0 : index
    %c0_15 = arith.constant 0 : index
    %31 = vector.load %arg4[%c0_13, %c0_14, %c0_15] : memref<1x1x256xf32, #tpu.memory_space<vmem>>, vector<1x1x256xf32>
    %32 = vector.shape_cast %31 : vector<1x1x256xf32> to vector<1x256xf32>
    %33 = arith.addf %32, %30 : vector<1x256xf32>
    %c0_16 = arith.constant 0 : index
    %c0_17 = arith.constant 0 : index
    %c0_18 = arith.constant 0 : index
    %34 = vector.load %arg4[%c0_16, %c0_17, %c0_18] : memref<1x1x256xf32, #tpu.memory_space<vmem>>, vector<1x1x256xf32>
    %35 = vector.shape_cast %34 : vector<1x1x256xf32> to vector<1x256xf32>
    %36 = vector.shape_cast %33 : vector<1x256xf32> to vector<1x1x256xf32>
    tpu.vector_store %arg4[%c0_16, %c0_17, %c0_18], %36 {strides = array<i32>} : memref<1x1x256xf32, #tpu.memory_space<vmem>>, vector<1x1x256xf32>,
    %c0_19 = arith.constant 0 : index
    %c0_20 = arith.constant 0 : index
    %c0_21 = arith.constant 0 : index
    %37 = vector.load %arg5[%c0_19, %c0_20, %c0_21] : memref<1x1x256xf32, #tpu.memory_space<vmem>>, vector<1x1x256xf32>
    %38 = vector.shape_cast %37 : vector<1x1x256xf32> to vector<1x256xf32>
    %39 = arith.addf %38, %10 : vector<1x256xf32>
    %c0_22 = arith.constant 0 : index
    %c0_23 = arith.constant 0 : index
    %c0_24 = arith.constant 0 : index
    %40 = vector.load %arg5[%c0_22, %c0_23, %c0_24] : memref<1x1x256xf32, #tpu.memory_space<vmem>>, vector<1x1x256xf32>
    %41 = vector.shape_cast %40 : vector<1x1x256xf32> to vector<1x256xf32>
    %42 = vector.shape_cast %39 : vector<1x256xf32> to vector<1x1x256xf32>
    tpu.vector_store %arg5[%c0_22, %c0_23, %c0_24], %42 {strides = array<i32>} : memref<1x1x256xf32, #tpu.memory_space<vmem>>, vector<1x1x256xf32>,
    return
  }
  func.func @transform_0(%arg0: i32, %arg1: i32) -> (i32, i32, i32) {
    %c0_i32 = arith.constant 0 : i32
    %c0_i32_0 = arith.constant 0 : i32
    return %arg0, %c0_i32, %arg1 : i32, i32, i32
  }
  func.func @transform_1(%arg0: i32, %arg1: i32) -> (i32, i32, i32) {
    %c0_i32 = arith.constant 0 : i32
    %c0_i32_0 = arith.constant 0 : i32
    return %arg0, %c0_i32, %arg1 : i32, i32, i32
  }
  func.func @transform_2(%arg0: i32, %arg1: i32) -> (i32, i32, i32) {
    %c0_i32 = arith.constant 0 : i32
    %c0_i32_0 = arith.constant 0 : i32
    %c0_i32_1 = arith.constant 0 : i32
    return %arg0, %c0_i32, %c0_i32_0 : i32, i32, i32
  }
  func.func @transform_3(%arg0: i32, %arg1: i32) -> (i32, i32, i32) {
    %c0_i32 = arith.constant 0 : i32
    %c0_i32_0 = arith.constant 0 : i32
    %c0_i32_1 = arith.constant 0 : i32
    return %arg0, %c0_i32, %c0_i32_0 : i32, i32, i32
  }
}

</mosaic_0001>

<llo_original>
// kernel: tpu_custom_call.1
$region0: #{tpu_custom_call.1}
  #allocation0 [shape = 'u32[]', space=smem, size = 0x4, offset = 0x4, fixed_abs, tag = 'smem constant byte address 0x4 - core index']
  #allocation1 [shape = 'u32[144,128]{1,0:T(1,128)}', space=vmem, size = 0x12000, scoped, tag = 'internal scratch']
  #allocation2 [shape = 's32[4,256]{1,0:T(4,128)}', space=vmem, size = 0x1000, scoped, tag = 'scratch operand']
  %s0 = inlined_call_operand.hbm [shape: f32[2,4,256], index: 0, kind: input, shape index: {}]
  %s1 = inlined_call_operand.hbm [shape: s32[2,1,256], index: 1, kind: input, shape index: {}]
  %s2 = inlined_call_operand.hbm [shape: f32[2,1,256], index: 2, kind: output, shape index: {0}]
  %s3 = inlined_call_operand.hbm [shape: f32[2,1,256], index: 3, kind: output, shape index: {1}]
  %4 = xla_tuple %s2, %s3
  %s5 = sld [smem:[#allocation0]]
  $region61: #{tpu_custom_call.1} parent=0
    _
  %s7 = ssub.s32 1, %s5
  %s8 = scalar_select 0, %s7, %s5
  $region1: #{tpu_custom_call.1} parent=0
    #allocation3 [shape = 'u8[8192]{0}', space=vmem, size = 0x2000, scoped, tag = 'input window, operand 0']
    #allocation4 [shape = 's32[2]{0}', space=sflag, size = 0x8, scoped, tag = 'scoped memory for tpu_custom_call.1']
    #allocation5 [shape = 's32[2]{0}', space=sflag, size = 0x8, scoped, tag = 'scoped memory for tpu_custom_call.1']
    #allocation6 [shape = 'u8[2048]{0}', space=vmem, size = 0x800, scoped, tag = 'input window, operand 1']
    #allocation7 [shape = 's32[2]{0}', space=sflag, size = 0x8, scoped, tag = 'scoped memory for tpu_custom_call.1']
    #allocation8 [shape = 'u8[2048]{0}', space=vmem, size = 0x800, scoped, tag = 'output window, operand 0']
    #allocation9 [shape = 'u8[2048]{0}', space=vmem, size = 0x800, scoped, tag = 'output window, operand 1']
    #allocation10 [shape = 's32[2]{0}', space=sflag, size = 0x8, scoped, tag = 'scoped memory for tpu_custom_call.1']
    %9 = vsyncpa [#allocation4], 0
    %s10 = scalar_lea.sflag [#allocation4], 1
    %11 = vsyncpa %s10, 0
    %12 = vsyncpa [#allocation7], 0
    %s13 = scalar_lea.sflag [#allocation7], 1
    %14 = vsyncpa %s13, 0
    %15 = vsyncpa [#allocation5], 0
    %s16 = scalar_lea.sflag [#allocation5], 1
    %17 = vsyncpa %s16, 0
    %18 = vsyncpa [#allocation10], 0
    %s19 = scalar_lea.sflag [#allocation10], 1
    %20 = vsyncpa %s19, 0
    loop: start=0, step=1, limit=4
    $region2: #{tpu_custom_call.1} parent=1 // loop_pre_header
      _
    $region3: #{tpu_custom_call.1} parent=1 // loop_header
      %s22 = sphi 0, %s26
      %p23 = scmp.ge.s32.totalorder %s22, 4
      %s29 = sphi 0, %s41
      %s30 = sphi 0, %s37
      %s31 = sphi 0, %s29
      %s32 = sphi 0, %s30
      %s33 = sphi 0, %s31
      %s34 = sphi 0, %s32
      %s46 = sphi 0, %s48
      %s49 = sphi 0, %s46
      %s50 = sphi 0, %s49
      %s66 = sphi 0, %s50
      %s74 = sphi 0, %s76
      %s77 = sphi 0, %s74
      %s78 = sphi 0, %s77
      %s94 = sphi 0, %s78
      %s100 = sphi 0, %s102
      %s103 = sphi 0, %s100
      %s104 = sphi 0, %s103
      %s120 = sphi 0, %s104
      %s126 = sphi 0, %s128
      %s129 = sphi 0, %s126
      %s130 = sphi 0, %s129
      %s146 = sphi 0, %s130
    $region4: #{tpu_custom_call.1} parent=1 // loop_header_branch
      %25 = sbr.rel (%p23) target = $region8
    $region5: #{tpu_custom_call.1} parent=1 // loop_body
      %s27 = ssub.s32 %s22, 1
      %s28 = ssub.s32 %s22, 2
      %s35 = sadd.s32 1, %s30
      %p36 = scmp.ge.s32.totalorder %s35, 1
      %s37 = scalar_select %p36, 0, %s35
      %s38 = sadd.s32 1, %s29
      %s39 = scalar_select %p36, %s38, %s29
      %p40 = scmp.ge.s32.totalorder %s39, 2
      %s41 = scalar_select %p40, 0, %s39
      %s42 = ssub.s32 %s29, %s41
      %s43 = ssub.s32 %s30, %s37
      %s44 = sor.u32 %s42, %s43
      %p45 = scmp.eq.s32.totalorder %s44, 0
      %s47 = sadd.s32 %s46, 1
      %s48 = scalar_select %p45, %s46, %s47
      %p51 = pneg %p45
      %p52 = scmp.eq.s32.totalorder %s22, 1
      %p53 = por %p51, %p52
      %p54 = scmp.ne.s32.totalorder %s46, %s49
      %p55 = scmp.eq.s32.totalorder %s22, 0
      %p56 = por %p54, %p55
      %p57 = scmp.ne.s32.totalorder %s46, %s49
      %p58 = scmp.eq.s32.totalorder %s27, 1
      %p59 = por %p57, %p58
      %p60 = scmp.ne.s32.totalorder %s49, %s50
      %p61 = scmp.eq.s32.totalorder %s27, 0
      %p62 = por %p60, %p61
      %p63 = scmp.ne.s32.totalorder %s49, %s50
      %p64 = scmp.eq.s32.totalorder %s28, 1
      %p65 = por %p63, %p64
      %p67 = scmp.ne.s32.totalorder %s50, %s66
      %p68 = scmp.eq.s32.totalorder %s28, 0
      %p69 = por %p67, %p68
      %s70 = ssub.s32 %s29, %s41
      %s71 = ssub.s32 %s30, %s37
      %s72 = sor.u32 %s70, %s71
      %p73 = scmp.eq.s32.totalorder %s72, 0
      %s75 = sadd.s32 %s74, 1
      %s76 = scalar_select %p73, %s74, %s75
      %p79 = pneg %p73
      %p80 = scmp.eq.s32.totalorder %s22, 1
      %p81 = por %p79, %p80
      %p82 = scmp.ne.s32.totalorder %s74, %s77
      %p83 = scmp.eq.s32.totalorder %s22, 0
      %p84 = por %p82, %p83
      %p85 = scmp.ne.s32.totalorder %s74, %s77
      %p86 = scmp.eq.s32.totalorder %s27, 1
      %p87 = por %p85, %p86
      %p88 = scmp.ne.s32.totalorder %s77, %s78
      %p89 = scmp.eq.s32.totalorder %s27, 0
      %p90 = por %p88, %p89
      %p91 = scmp.ne.s32.totalorder %s77, %s78
      %p92 = scmp.eq.s32.totalorder %s28, 1
      %p93 = por %p91, %p92
      %p95 = scmp.ne.s32.totalorder %s78, %s94
      %p96 = scmp.eq.s32.totalorder %s28, 0
      %p97 = por %p95, %p96
      %s98 = ssub.s32 %s29, %s41
      %p99 = scmp.eq.s32.totalorder %s98, 0
      %s101 = sadd.s32 %s100, 1
      %s102 = scalar_select %p99, %s100, %s101
      %p105 = pneg %p99
      %p106 = scmp.eq.s32.totalorder %s22, 1
      %p107 = por %p105, %p106
      %p108 = scmp.ne.s32.totalorder %s100, %s103
      %p109 = scmp.eq.s32.totalorder %s22, 0
      %p110 = por %p108, %p109
      %p111 = scmp.ne.s32.totalorder %s100, %s103
      %p112 = scmp.eq.s32.totalorder %s27, 1
      %p113 = por %p111, %p112
      %p114 = scmp.ne.s32.totalorder %s103, %s104
      %p115 = scmp.eq.s32.totalorder %s27, 0
      %p116 = por %p114, %p115
      %p117 = scmp.ne.s32.totalorder %s103, %s104
      %p118 = scmp.eq.s32.totalorder %s28, 1
      %p119 = por %p117, %p118
      %p121 = scmp.ne.s32.totalorder %s104, %s120
      %p122 = scmp.eq.s32.totalorder %s28, 0
      %p123 = por %p121, %p122
      %s124 = ssub.s32 %s29, %s41
      %p125 = scmp.eq.s32.totalorder %s124, 0
      %s127 = sadd.s32 %s126, 1
      %s128 = scalar_select %p125, %s126, %s127
      %p131 = pneg %p125
      %p132 = scmp.eq.s32.totalorder %s22, 1
      %p133 = por %p131, %p132
      %p134 = scmp.ne.s32.totalorder %s126, %s129
      %p135 = scmp.eq.s32.totalorder %s22, 0
      %p136 = por %p134, %p135
      %p137 = scmp.ne.s32.totalorder %s126, %s129
      %p138 = scmp.eq.s32.totalorder %s27, 1
      %p139 = por %p137, %p138
      %p140 = scmp.ne.s32.totalorder %s129, %s130
      %p141 = scmp.eq.s32.totalorder %s27, 0
      %p142 = por %p140, %p141
      %p143 = scmp.ne.s32.totalorder %s129, %s130
      %p144 = scmp.eq.s32.totalorder %s28, 1
      %p145 = por %p143, %p144
      %p147 = scmp.ne.s32.totalorder %s130, %s146
      %p148 = scmp.eq.s32.totalorder %s28, 0
      %p149 = por %p147, %p148
      %p150 = scmp.le.s32.totalorder 1, %s22
      %p151 = scmp.lt.s32.totalorder %s22, 3
      %p152 = pnand %p150, %p151
      %p153 = pneg %p152
      // Predicated region
      $region9: #{tpu_custom_call.1} parent=5 // pred_check
        _
      $region10: #{tpu_custom_call.1} parent=5 // pred_check_branch
        %155 = sbr.rel (%p152) target = $region12
      $region11: #{tpu_custom_call.1} parent=5 // pred_region
        %s156 = ssub.s32 %s22, 1
      $region12: #{tpu_custom_call.1} parent=5 // pred_fallthru
        _
      %p157 = scmp.lt.s32.totalorder %s22, 2
      // Predicated region
      $region13: #{tpu_custom_call.1} parent=5 // pred_check
        %p158 = pneg %p157
      $region14: #{tpu_custom_call.1} parent=5 // pred_check_branch
        %160 = sbr.rel (%p158) target = $region16
      $region15: #{tpu_custom_call.1} parent=5 // pred_region
        // Predicated region
        $region17: #{tpu_custom_call.1} parent=15 // pred_check
          %p161 = pneg %p56
        $region18: #{tpu_custom_call.1} parent=15 // pred_check_branch
          %163 = sbr.rel (%p161) target = $region20
        $region19: #{tpu_custom_call.1} parent=15 // pred_region
          %s164 = sand.u32 %s46, 1
          %s165 = scalar_lea.sflag [#allocation4], %s164
          %s166 = sand.u32 %s46, 1
          %s167 = smul.addr %s166, 8
          %s168 = scalar_lea.vmem [#allocation3], %s167
          %s169 = smul.u32 2, %s30
          %s171 = ssub.s32 128, 128
          %172 = vsyncadd %s165, %s171
          %s173 = smul.addr %s29, 2
          %s174 = sadd.s32 %s169, %s173
          %s175 = smul.addr %s174, 64
          %s176 = scalar_lea.hbm %s0, %s175
          %s178 = sshll.u32 %s168, 4
          %s179 = int_to_ptr.vmem [resolvable:$true] %s178
          %181 = dma.hbm_to_vmem [thread:$0]  %s176, 128, %s179, %s165
        $region20: #{tpu_custom_call.1} parent=15 // pred_fallthru
          _
        // Predicated region
        $region21: #{tpu_custom_call.1} parent=15 // pred_check
          %p182 = pneg %p84
        $region22: #{tpu_custom_call.1} parent=15 // pred_check_branch
          %184 = sbr.rel (%p182) target = $region24
        $region23: #{tpu_custom_call.1} parent=15 // pred_region
          %s185 = sand.u32 %s74, 1
          %s186 = scalar_lea.sflag [#allocation7], %s185
          %s187 = sand.u32 %s74, 1
          %s188 = smul.addr %s187, 2
          %s189 = scalar_lea.vmem [#allocation6], %s188
          %s190 = smul.u32 2, %s30
          %s192 = ssub.s32 32, 32
          %193 = vsyncadd %s186, %s192
          %s194 = smul.addr %s29, 2
          %s195 = sadd.s32 %s190, %s194
          %s196 = smul.addr %s195, 16
          %s197 = scalar_lea.hbm %s1, %s196
          %s199 = sshll.u32 %s189, 4
          %s200 = int_to_ptr.vmem [resolvable:$true] %s199
          %202 = dma.hbm_to_vmem [thread:$0]  %s197, 32, %s200, %s186
        $region24: #{tpu_custom_call.1} parent=15 // pred_fallthru
          _
      $region16: #{tpu_custom_call.1} parent=5 // pred_fallthru
        _
      %p203 = scmp.le.s32.totalorder 1, %s22
      %p204 = scmp.lt.s32.totalorder %s22, 3
      %p205 = pnand %p203, %p204
      %p206 = pneg %p205
      // Predicated region
      $region25: #{tpu_custom_call.1} parent=5 // pred_check
        _
      $region26: #{tpu_custom_call.1} parent=5 // pred_check_branch
        %208 = sbr.rel (%p205) target = $region28
      $region27: #{tpu_custom_call.1} parent=5 // pred_region
        %s209 = ssub.s32 %s22, 1
        %s210 = sand.u32 %s49, 1
        %s211 = scalar_lea.sflag [#allocation4], %s210
        %s212 = sand.u32 %s49, 1
        %s213 = smul.addr %s212, 8
        %s214 = scalar_lea.vmem [#allocation3], %s213
        // Predicated region
        $region29: #{tpu_custom_call.1} parent=27 // pred_check
          %p215 = pneg %p62
        $region30: #{tpu_custom_call.1} parent=27 // pred_check_branch
          %217 = sbr.rel (%p215) target = $region32
        $region31: #{tpu_custom_call.1} parent=27 // pred_region
          %218 = dma.done %s211, 128
        $region32: #{tpu_custom_call.1} parent=27 // pred_fallthru
          _
        %s219 = sand.u32 %s77, 1
        %s220 = scalar_lea.sflag [#allocation7], %s219
        %s221 = sand.u32 %s77, 1
        %s222 = smul.addr %s221, 2
        %s223 = scalar_lea.vmem [#allocation6], %s222
        // Predicated region
        $region33: #{tpu_custom_call.1} parent=27 // pred_check
          %p224 = pneg %p90
        $region34: #{tpu_custom_call.1} parent=27 // pred_check_branch
          %226 = sbr.rel (%p224) target = $region36
        $region35: #{tpu_custom_call.1} parent=27 // pred_region
          %227 = dma.done %s220, 32
        $region36: #{tpu_custom_call.1} parent=27 // pred_fallthru
          _
        %s228 = sand.u32 %s49, 1
        %s229 = scalar_lea.sflag [#allocation4], %s228
        %s230 = sand.u32 %s49, 1
        %s231 = smul.addr %s230, 8
        %s232 = scalar_lea.vmem [#allocation3], %s231
        %p233 = pneg %p62
        %p234 = pneg %p59
        %s235 = sand.u32 %s77, 1
        %s236 = scalar_lea.sflag [#allocation7], %s235
        %s237 = sand.u32 %s77, 1
        %s238 = smul.addr %s237, 2
        %s239 = scalar_lea.vmem [#allocation6], %s238
        %p240 = pneg %p90
        %p241 = pneg %p87
        %p242 = pneg %p116
        %p243 = pneg %p113
        %s244 = sand.u32 %s103, 1
        %s245 = scalar_lea.sflag [#allocation5], %s244
        %s246 = sand.u32 %s103, 1
        %s247 = smul.addr %s246, 2
        %s248 = scalar_lea.vmem [#allocation8], %s247
        %p249 = pneg %p142
        %p250 = pneg %p139
        %s251 = sand.u32 %s129, 1
        %s252 = scalar_lea.sflag [#allocation10], %s251
        %s253 = sand.u32 %s129, 1
        %s254 = smul.addr %s253, 2
        %s255 = scalar_lea.vmem [#allocation9], %s254
        %s256 = smul.u32 2, %s32
        %s257 = smul.u32 2, %s32
        %p258 = scmp.eq.s32.totalorder %s32, 0
        // Predicated region
        $region37: #{tpu_custom_call.1} parent=27 // pred_check
          %p259 = pneg %p258
        $region38: #{tpu_custom_call.1} parent=27 // pred_check_branch
          %261 = sbr.rel (%p259) target = $region40
        $region39: #{tpu_custom_call.1} parent=27 // pred_region
          %v262 = vlaneseq
          %vm263 = vcmp.ge.s32.totalorder %v262, 0
          %vm264 = vcmp.lt.s32.totalorder %v262, 256
          %vm265 = vmand %vm263, %vm264
          %266 = vst.msk [vmem:[%s248] sm:$0x3] %vm265, 0.0
          %267 = vst.msk [vmem:[%s255] sm:$0x3] %vm265, 0.0
          %v268 = vlaneseq
          %v269 = vshrl.u32 %v268, 7
          %v271 = vunpack.c.l.s4 839922192
          %v272 = vunpack.c.0.s8 %v271
          %v273 = vlaneseq
          %v274 = vshrl.u32 %v273, 7
          %v275 = vsub.s32 %v272, %v274
          %v276 = vrot.slane %v269, %v275
          %277 = vst [vmem:[#allocation2] sm:$0xff] %v276
        $region40: #{tpu_custom_call.1} parent=27 // pred_fallthru
          _
        %v278 = vld [vmem:[%s214] sm:$0xff]
        %v279 = vld [vmem:[%s223] sm:$0x3]
        %vm280 = vcmp.ne.s32.totalorder %v279, 255
        %v281 = vsel %vm280, 1, 0
        %v282 = vcvt.s32.f32 %v281
        %v283 = vsel %vm280, %v279, 0
        %v285 = vcombine.high %v278, %v278
        %vm287 = vcmask 1043456
        %v288 = vsel %vm287, %v278, -inf
        %v289 = vrot.slane %v288, 4
        %v290 = vmax.f32 %v288, %v289
        %v291 = vrot.slane %v290, 2
        %v292 = vmax.f32 %v290, %v291
        %v293 = vrot.slane %v292, 1
        %v294 = vmax.f32 %v292, %v293
        %v295 = vsel %vm287, %v285, -inf
        %v296 = vrot.slane %v295, 4
        %v297 = vmax.f32 %v295, %v296
        %v298 = vrot.slane %v297, 2
        %v299 = vmax.f32 %v297, %v298
        %v300 = vrot.slane %v299, 1
        %v301 = vmax.f32 %v299, %v300
        %v304 = vcombine.low %v294, %v301
        %v306 = vsub.f32 %v278, %v304
        %v307 = vmul.f32 %v306, 1.442695
        %v308 = vpow.pop %v307
        %v310 = vcombine.high %v308, %v308
        %v312 = vsel %vm287, %v308, 0.0
        %v313 = vrot.slane %v312, 4
        %v314 = vadd.f32 %v312, %v313
        %v315 = vrot.slane %v314, 2
        %v316 = vadd.f32 %v314, %v315
        %v317 = vrot.slane %v316, 1
        %v318 = vadd.f32 %v316, %v317
        %v319 = vsel %vm287, %v310, 0.0
        %v320 = vrot.slane %v319, 4
        %v321 = vadd.f32 %v319, %v320
        %v322 = vrot.slane %v321, 2
        %v323 = vadd.f32 %v321, %v322
        %v324 = vrot.slane %v323, 1
        %v325 = vadd.f32 %v323, %v324
        %v326 = vlog2.pop %v318
        %v327 = vmul.f32 %v326, 0.6931472
        %v328 = vlog2.pop %v325
        %v329 = vmul.f32 %v328, 0.6931472
        %v330 = vld [vmem:[#allocation2] sm:$0xff]
        %v331 = vlaneseq
        %v332 = vshrl.u32 %v331, 7
        %v333 = vsub.s32 0, %v332
        %v334 = vrot.slane %v283, %v333
        %v335 = vlaneseq
        %v336 = vshrl.u32 %v335, 7
        %v337 = vsub.s32 1, %v336
        %v338 = vrot.slane %v283, %v337
        %v339 = vcombine.low %v334, %v338
        %vm340 = vcmp.eq.s32.totalorder %v330, %v339
        %v341 = vsel %vm340, %v306, 0.0
        %v343 = vcombine.high %v341, %v341
        %v345 = vsel %vm287, %v341, 0.0
        %v346 = vrot.slane %v345, 4
        %v347 = vadd.f32 %v345, %v346
        %v348 = vrot.slane %v347, 2
        %v349 = vadd.f32 %v347, %v348
        %v350 = vrot.slane %v349, 1
        %v351 = vadd.f32 %v349, %v350
        %v352 = vsel %vm287, %v343, 0.0
        %v353 = vrot.slane %v352, 4
        %v354 = vadd.f32 %v352, %v353
        %v355 = vrot.slane %v354, 2
        %v356 = vadd.f32 %v354, %v355
        %v357 = vrot.slane %v356, 1
        %v358 = vadd.f32 %v356, %v357
        %v359 = vsub.f32 %v327, %v351
        %v360 = vsub.f32 %v329, %v358
        %v363 = vcombine.low %v359, %v360
        %v365 = vunpack.c.l.s4 1966171168
        %v366 = vunpack.c.0.s8 %v365
        %v367 = vlaneseq
        %v368 = vshrl.u32 %v367, 7
        %v369 = vsub.s32 %v366, %v368
        %v370 = vrot.slane %v363, %v369
        %v372 = vunpack.c.l.s4 1966171168
        %v373 = vunpack.c.0.s8 %v372
        %v374 = vlaneseq
        %v375 = vshrl.u32 %v374, 7
        %v376 = vsub.s32 %v373, %v375
        %v377 = vrot.slane %v370, %v376
        %v379 = vsel %vm280, %v377, 0.0
        %v380 = vld [vmem:[%s248] sm:$0x3]
        %v381 = vadd.f32 %v380, %v379
        %v382 = vlaneseq
        %vm383 = vcmp.ge.s32.totalorder %v382, 0
        %vm384 = vcmp.lt.s32.totalorder %v382, 256
        %vm385 = vmand %vm383, %vm384
        %386 = vst.msk [vmem:[%s248] sm:$0x3] %vm385, %v381
        %v387 = vld [vmem:[%s255] sm:$0x3]
        %v388 = vadd.f32 %v387, %v282
        %389 = vst.msk [vmem:[%s255] sm:$0x3] %vm385, %v388
        %s390 = sand.u32 %s103, 1
        %s391 = scalar_lea.sflag [#allocation5], %s390
        %s392 = sand.u32 %s103, 1
        %s393 = smul.addr %s392, 2
        %s394 = scalar_lea.vmem [#allocation8], %s393
        %s395 = sand.u32 %s129, 1
        %s396 = scalar_lea.sflag [#allocation10], %s395
        %s397 = sand.u32 %s129, 1
        %s398 = smul.addr %s397, 2
        %s399 = scalar_lea.vmem [#allocation9], %s398
        // Predicated region
        $region41: #{tpu_custom_call.1} parent=27 // pred_check
          %p400 = pneg %p113
        $region42: #{tpu_custom_call.1} parent=27 // pred_check_branch
          %402 = sbr.rel (%p400) target = $region44
        $region43: #{tpu_custom_call.1} parent=27 // pred_region
          %s404 = ssub.s32 32, 32
          %405 = vsyncadd %s391, %s404
          %s406 = smul.addr %s31, 2
          %s407 = smul.addr %s406, 16
          %s408 = scalar_lea.hbm %s2, %s407
          %s410 = sshll.u32 %s394, 4
          %s411 = int_to_ptr.vmem [resolvable:$true] %s410
          %413 = dma.vmem_to_hbm [thread:$0]  %s411, 32, %s408, %s391
        $region44: #{tpu_custom_call.1} parent=27 // pred_fallthru
          _
        // Predicated region
        $region45: #{tpu_custom_call.1} parent=27 // pred_check
          %p414 = pneg %p139
        $region46: #{tpu_custom_call.1} parent=27 // pred_check_branch
          %416 = sbr.rel (%p414) target = $region48
        $region47: #{tpu_custom_call.1} parent=27 // pred_region
          %s418 = ssub.s32 32, 32
          %419 = vsyncadd %s396, %s418
          %s420 = smul.addr %s31, 2
          %s421 = smul.addr %s420, 16
          %s422 = scalar_lea.hbm %s3, %s421
          %s424 = sshll.u32 %s399, 4
          %s425 = int_to_ptr.vmem [resolvable:$true] %s424
          %427 = dma.vmem_to_hbm [thread:$0]  %s425, 32, %s422, %s396
        $region48: #{tpu_custom_call.1} parent=27 // pred_fallthru
          _
      $region28: #{tpu_custom_call.1} parent=5 // pred_fallthru
        _
      %p428 = scmp.le.s32.totalorder 2, %s22
      // Predicated region
      $region49: #{tpu_custom_call.1} parent=5 // pred_check
        %p429 = pneg %p428
      $region50: #{tpu_custom_call.1} parent=5 // pred_check_branch
        %431 = sbr.rel (%p429) target = $region52
      $region51: #{tpu_custom_call.1} parent=5 // pred_region
        %s432 = ssub.s32 %s22, 2
        // Predicated region
        $region53: #{tpu_custom_call.1} parent=51 // pred_check
          %p433 = pneg %p119
        $region54: #{tpu_custom_call.1} parent=51 // pred_check_branch
          %435 = sbr.rel (%p433) target = $region56
        $region55: #{tpu_custom_call.1} parent=51 // pred_region
          %s436 = sand.u32 %s104, 1
          %s437 = scalar_lea.sflag [#allocation5], %s436
          %s438 = sand.u32 %s104, 1
          %s439 = smul.addr %s438, 2
          %s440 = scalar_lea.vmem [#allocation8], %s439
          %441 = dma.done %s437, 32
        $region56: #{tpu_custom_call.1} parent=51 // pred_fallthru
          _
        // Predicated region
        $region57: #{tpu_custom_call.1} parent=51 // pred_check
          %p442 = pneg %p145
        $region58: #{tpu_custom_call.1} parent=51 // pred_check_branch
          %444 = sbr.rel (%p442) target = $region60
        $region59: #{tpu_custom_call.1} parent=51 // pred_region
          %s445 = sand.u32 %s130, 1
          %s446 = scalar_lea.sflag [#allocation10], %s445
          %s447 = sand.u32 %s130, 1
          %s448 = smul.addr %s447, 2
          %s449 = scalar_lea.vmem [#allocation9], %s448
          %450 = dma.done %s446, 32
        $region60: #{tpu_custom_call.1} parent=51 // pred_fallthru
          _
      $region52: #{tpu_custom_call.1} parent=5 // pred_fallthru
        _
    $region6: #{tpu_custom_call.1} parent=1 // loop_footer
      %s26 = sadd.s32 1, %s22
    $region7: #{tpu_custom_call.1} parent=1 // loop_footer_branch
      %21 = sbr.rel target = $region3
    $region8: #{tpu_custom_call.1} parent=1 // loop_exit
      _
    %451 = vsyncpa [#allocation4], 1
    %s452 = scalar_lea.sflag [#allocation4], 1
    %453 = vsyncpa %s452, 1
    %454 = vsyncpa [#allocation7], 1
    %s455 = scalar_lea.sflag [#allocation7], 1
    %456 = vsyncpa %s455, 1
    %457 = vsyncpa [#allocation5], 1
    %s458 = scalar_lea.sflag [#allocation5], 1
    %459 = vsyncpa %s458, 1
    %460 = vsyncpa [#allocation10], 1
    %s461 = scalar_lea.sflag [#allocation10], 1
    %462 = vsyncpa %s461, 1

</llo_original>
